<compile_context>
chip_gen: v6e
topology: v6e:2x2x1
jax: 0.10.0
libtpu: 0.0.40
codegen_flags: <defaults>
</compile_context>

<pallas_src>
import functools

import jax
import jax.numpy as jnp
from jax.experimental import pallas as pl
from jax.experimental.pallas import tpu as pltpu


def _round_up(x, m):
    return (x + m - 1) // m * m


def mlp_softmax_kernel(x_ref, w1_ref, b1_ref, w2_ref, b2_ref, o_ref):
    # Hidden layer: Linear + ReLU (f32 accumulation on the MXU).
    x = x_ref[...]
    h = jnp.dot(x, w1_ref[...], preferred_element_type=jnp.float32) + b1_ref[...]
    h = jnp.maximum(h, 0.0)

    # Output layer: Linear.
    logits = jnp.dot(h, w2_ref[...], preferred_element_type=jnp.float32) + b2_ref[...]

    # Numerically stable softmax over the class axis.  Row max / row sum go to
    # the XLU (its own slot), exp to the EUP, and the divide is replaced by
    # pl.reciprocal so it also lands on the EUP instead of a VPU divide chain.
    m = jnp.max(logits, axis=-1, keepdims=True)
    e = jnp.exp(logits - m)
    denom = jnp.sum(e, axis=-1, keepdims=True)
    o_ref[...] = (e * pl.reciprocal(denom, approx=False)).astype(o_ref.dtype)


def prepare_params(w1, b1, w2, b2):
    """One-time parameter prep (call at model-load time, NOT per forward call).

    Transposes weights to (in_features, out_features) and reshapes biases to
    (1, out_features) so the kernel runs plain row-major (M,K)@(K,N) matmuls
    on the MXU and no transpose/reshape sits on the per-call hot path.
    """
    return (w1.T, b1.reshape(1, -1), w2.T, b2.reshape(1, -1))


@functools.partial(jax.jit, static_argnames=("block_rows",))
def survival_predictor_forward(x, w1_t, b1_2d, w2_t, b2_2d, *, block_rows=512):
    """x: (B, input_size) f32; params pre-prepared by prepare_params().
    Returns (B, output_size) softmax probabilities (f32)."""
    batch, input_size = x.shape
    hidden = w1_t.shape[1]
    output = w2_t.shape[1]

    # Batch tile: multiple of 8 (full-sublane stores) and large enough to
    # amortize per-grid-step overhead when batch is big.
    tm = min(block_rows, _round_up(batch, 8))
    padded_batch = _round_up(batch, tm)
    if padded_batch != batch:
        # Zero-pad extra rows; they produce a uniform softmax and are sliced off.
        x = jnp.pad(x, ((0, padded_batch - batch), (0, 0)))
    grid = (padded_batch // tm,)

    bytes_accessed = 4 * (
        padded_batch * input_size          # x
        + input_size * hidden + hidden     # w1, b1
        + hidden * output + output         # w2, b2
        + padded_batch * output            # out
    )
    cost = pl.CostEstimate(
        flops=2 * padded_batch * (input_size * hidden + hidden * output),
        transcendentals=padded_batch * (output + 1),  # exp per class + reciprocal per row
        bytes_accessed=bytes_accessed,
    )

    out = pl.pallas_call(
        mlp_softmax_kernel,
        out_shape=jax.ShapeDtypeStruct((padded_batch, output), jnp.float32),
        grid=grid,
        in_specs=[
            pl.BlockSpec((tm, input_size), lambda i: (i, 0)),      # x: batch-tiled
            pl.BlockSpec((input_size, hidden), lambda i: (0, 0)),  # w1_t: VMEM-resident
            pl.BlockSpec((1, hidden), lambda i: (0, 0)),           # b1:   VMEM-resident
            pl.BlockSpec((hidden, output), lambda i: (0, 0)),      # w2_t: VMEM-resident
            pl.BlockSpec((1, output), lambda i: (0, 0)),           # b2:   VMEM-resident
        ],
        out_specs=pl.BlockSpec((tm, output), lambda i: (i, 0)),
        compiler_params=pltpu.CompilerParams(
            dimension_semantics=("parallel",),  # lets v7x split batch across 2 TCs
        ),
        cost_estimate=cost,
    )(x, w1_t, b1_2d, w2_t, b2_2d)

    return out[:batch]


def reference_forward(x, w1, b1, w2, b2):
    h = jnp.maximum(x @ w1.T + b1, 0.0)
    logits = h @ w2.T + b2
    return jax.nn.softmax(logits, axis=-1)


if __name__ == "__main__":
    # Shapes implied by the module: x is (batch, input_size); here batch=8,
    # input_size=16, hidden_size=32, output_size=4.
    batch, input_size, hidden_size, output_size = 8, 16, 32, 4

    key = jax.random.PRNGKey(0)
    kx, kw1, kb1, kw2, kb2 = jax.random.split(key, 5)

    x = jax.random.normal(kx, (batch, input_size), dtype=jnp.float32)

    # Deterministic parameter init (PyTorch-style uniform fan-in bound).
    bound1 = 1.0 / (input_size ** 0.5)
    w1 = jax.random.uniform(kw1, (hidden_size, input_size), jnp.float32, -bound1, bound1)
    b1 = jax.random.uniform(kb1, (hidden_size,), jnp.float32, -bound1, bound1)
    bound2 = 1.0 / (hidden_size ** 0.5)
    w2 = jax.random.uniform(kw2, (output_size, hidden_size), jnp.float32, -bound2, bound2)
    b2 = jax.random.uniform(kb2, (output_size,), jnp.float32, -bound2, bound2)

    # One-time parameter prep (off the hot path).
    w1_t, b1_2d, w2_t, b2_2d = prepare_params(w1, b1, w2, b2)

    out = survival_predictor_forward(x, w1_t, b1_2d, w2_t, b2_2d)
    out = jax.block_until_ready(out)

    ref = reference_forward(x, w1, b1, w2, b2)
    assert out.shape == (batch, output_size)
    assert jnp.allclose(out, ref, atol=1e-5, rtol=1e-5), "mismatch vs reference"
    assert jnp.allclose(jnp.sum(out, axis=-1), 1.0, atol=1e-5), "softmax rows must sum to 1"

    # Also exercise a non-tile-aligned batch to check the padding/slicing path.
    batch2 = 20
    x2 = jax.random.normal(jax.random.PRNGKey(1), (batch2, input_size), dtype=jnp.float32)
    out2 = jax.block_until_ready(
        survival_predictor_forward(x2, w1_t, b1_2d, w2_t, b2_2d))
    ref2 = reference_forward(x2, w1, b1, w2, b2)
    assert out2.shape == (batch2, output_size)
    assert jnp.allclose(out2, ref2, atol=1e-5, rtol=1e-5), "mismatch vs reference (padded batch)"

    print("KERNEL_OK")
</pallas_src>

<mosaic_0001>
module attributes {stable_mosaic.version = 11 : i64} {
  func.func @mlp_softmax_kernel(%arg0: i32, %arg1: memref<8x16xf32, #tpu.memory_space<vmem>>, %arg2: memref<16x32xf32, #tpu.memory_space<vmem>>, %arg3: memref<1x32xf32, #tpu.memory_space<vmem>>, %arg4: memref<32x4xf32, #tpu.memory_space<vmem>>, %arg5: memref<1x4xf32, #tpu.memory_space<vmem>>, %arg6: memref<8x4xf32, #tpu.memory_space<vmem>>) attributes {dimension_semantics = [#tpu.dimension_semantics<parallel>], iteration_bounds = array<i64: 1>, scalar_prefetch = 0 : i64, scratch_operands = 0 : i64, tpu.core_type = #tpu.core_type<tc>, window_params = [{transform_indices = @transform_0, window_bounds = array<i64: 8, 16>}, {pipeline_mode = #tpu.pipeline_mode<synchronous>, transform_indices = @transform_1, window_bounds = array<i64: 16, 32>}, {pipeline_mode = #tpu.pipeline_mode<synchronous>, transform_indices = @transform_2, window_bounds = array<i64: 1, 32>}, {pipeline_mode = #tpu.pipeline_mode<synchronous>, transform_indices = @transform_3, window_bounds = array<i64: 32, 4>}, {pipeline_mode = #tpu.pipeline_mode<synchronous>, transform_indices = @transform_4, window_bounds = array<i64: 1, 4>}, {transform_indices = @transform_5, window_bounds = array<i64: 8, 4>}]} {
    %c0 = arith.constant 0 : index
    %c0_0 = arith.constant 0 : index
    %0 = vector.load %arg1[%c0, %c0_0] : memref<8x16xf32, #tpu.memory_space<vmem>>, vector<8x16xf32>
    %c0_1 = arith.constant 0 : index
    %c0_2 = arith.constant 0 : index
    %1 = vector.load %arg2[%c0_1, %c0_2] : memref<16x32xf32, #tpu.memory_space<vmem>>, vector<16x32xf32>
    %cst = arith.constant dense<0.000000e+00> : vector<8x32xf32>
    %2 = tpu.matmul %0, %1, %cst {dimension_numbers = #tpu.dot_dimension_numbers<[1], [0], [0], [1], [0, 0, 1, 1], [], []>} : vector<8x16xf32>, vector<16x32xf32>, vector<8x32xf32> -> vector<8x32xf32>
    %c0_3 = arith.constant 0 : index
    %c0_4 = arith.constant 0 : index
    %3 = vector.load %arg3[%c0_3, %c0_4] : memref<1x32xf32, #tpu.memory_space<vmem>>, vector<1x32xf32>
    %4 = vector.broadcast %3 : vector<1x32xf32> to vector<8x32xf32>
    %5 = arith.addf %2, %4 : vector<8x32xf32>
    %cst_5 = arith.constant 0.000000e+00 : f32
    %6 = vector.broadcast %cst_5 : f32 to vector<8x32xf32>
    %7 = arith.maximumf %5, %6 : vector<8x32xf32>
    %c0_6 = arith.constant 0 : index
    %c0_7 = arith.constant 0 : index
    %8 = vector.load %arg4[%c0_6, %c0_7] : memref<32x4xf32, #tpu.memory_space<vmem>>, vector<32x4xf32>
    %cst_8 = arith.constant dense<0.000000e+00> : vector<8x4xf32>
    %9 = tpu.matmul %7, %8, %cst_8 {dimension_numbers = #tpu.dot_dimension_numbers<[1], [0], [0], [1], [0, 0, 1, 1], [], []>} : vector<8x32xf32>, vector<32x4xf32>, vector<8x4xf32> -> vector<8x4xf32>
    %c0_9 = arith.constant 0 : index
    %c0_10 = arith.constant 0 : index
    %10 = vector.load %arg5[%c0_9, %c0_10] : memref<1x4xf32, #tpu.memory_space<vmem>>, vector<1x4xf32>
    %11 = vector.broadcast %10 : vector<1x4xf32> to vector<8x4xf32>
    %12 = arith.addf %9, %11 : vector<8x4xf32>
    %cst_11 = arith.constant dense<0xFF800000> : vector<8xf32>
    %13 = vector.multi_reduction <maximumf>, %12, %cst_11 [1] : vector<8x4xf32> to vector<8xf32>
    %14 = vector.shape_cast %13 : vector<8xf32> to vector<8x1xf32>
    %15 = vector.broadcast %14 : vector<8x1xf32> to vector<8x4xf32>
    %16 = arith.subf %12, %15 : vector<8x4xf32>
    %17 = math.exp %16 : vector<8x4xf32>
    %cst_12 = arith.constant dense<0.000000e+00> : vector<8xf32>
    %18 = vector.multi_reduction <add>, %17, %cst_12 [1] : vector<8x4xf32> to vector<8xf32>
    %19 = vector.shape_cast %18 : vector<8xf32> to vector<8x1xf32>
    %20 = tpu.reciprocal %19 : vector<8x1xf32> -> vector<8x1xf32>
    %21 = vector.broadcast %20 : vector<8x1xf32> to vector<8x4xf32>
    %22 = arith.mulf %17, %21 : vector<8x4xf32>
    %c0_13 = arith.constant 0 : index
    %c0_14 = arith.constant 0 : index
    %23 = vector.load %arg6[%c0_13, %c0_14] : memref<8x4xf32, #tpu.memory_space<vmem>>, vector<8x4xf32>
    tpu.vector_store %arg6[%c0_13, %c0_14], %22 {strides = array<i32>} : memref<8x4xf32, #tpu.memory_space<vmem>>, vector<8x4xf32>,
    return
  }
  func.func @transform_0(%arg0: i32) -> (i32, i32) {
    %c0_i32 = arith.constant 0 : i32
    %c0_i32_0 = arith.constant 0 : i32
    return %arg0, %c0_i32 : i32, i32
  }
  func.func @transform_1(%arg0: i32) -> (i32, i32) {
    %c0_i32 = arith.constant 0 : i32
    %c0_i32_0 = arith.constant 0 : i32
    %c0_i32_1 = arith.constant 0 : i32
    return %c0_i32, %c0_i32_0 : i32, i32
  }
  func.func @transform_2(%arg0: i32) -> (i32, i32) {
    %c0_i32 = arith.constant 0 : i32
    %c0_i32_0 = arith.constant 0 : i32
    %c0_i32_1 = arith.constant 0 : i32
    return %c0_i32, %c0_i32_0 : i32, i32
  }
  func.func @transform_3(%arg0: i32) -> (i32, i32) {
    %c0_i32 = arith.constant 0 : i32
    %c0_i32_0 = arith.constant 0 : i32
    %c0_i32_1 = arith.constant 0 : i32
    return %c0_i32, %c0_i32_0 : i32, i32
  }
  func.func @transform_4(%arg0: i32) -> (i32, i32) {
    %c0_i32 = arith.constant 0 : i32
    %c0_i32_0 = arith.constant 0 : i32
    %c0_i32_1 = arith.constant 0 : i32
    return %c0_i32, %c0_i32_0 : i32, i32
  }
  func.func @transform_5(%arg0: i32) -> (i32, i32) {
    %c0_i32 = arith.constant 0 : i32
    %c0_i32_0 = arith.constant 0 : i32
    return %arg0, %c0_i32 : i32, i32
  }
}

</mosaic_0001>

<llo_original>
// kernel: survival_predictor_forward.1
$region0: #{survival_predictor_forward.1}
  #allocation0 [shape = 'u32[]', space=smem, size = 0x4, offset = 0x4, fixed_abs, tag = 'smem constant byte address 0x4 - core index']
  #allocation1 [shape = 'u32[144,128]{1,0:T(1,128)}', space=vmem, size = 0x12000, scoped, tag = 'internal scratch']
  %s0 = inlined_call_operand.vmem [shape: f32[8,16], index: 0, kind: input, shape index: {}]
  %s1 = inlined_call_operand.vmem [shape: f32[16,32], index: 1, kind: input, shape index: {}]
  %s2 = inlined_call_operand.vmem [shape: f32[1,32], index: 2, kind: input, shape index: {}]
  %s3 = inlined_call_operand.vmem [shape: f32[32,4], index: 3, kind: input, shape index: {}]
  %s4 = inlined_call_operand.vmem [shape: f32[1,4], index: 4, kind: input, shape index: {}]
  %s5 = inlined_call_operand.vmem [shape: f32[8,4], index: 5, kind: output, shape index: {}]
  %s6 = sld [smem:[#allocation0]]
  $region30: #{survival_predictor_forward.1} parent=0
    _
  %s8 = ssub.s32 1, %s6
  %s9 = scalar_select 0, %s8, %s6
  // Predicated region
  $region2: #{survival_predictor_forward.1} parent=0 // pred_check
    _
  $region3: #{survival_predictor_forward.1} parent=0 // pred_check_branch
    %11 = sbr.rel (0) target = $region5
  $region4: #{survival_predictor_forward.1} parent=0 // pred_region
    _
  $region5: #{survival_predictor_forward.1} parent=0 // pred_fallthru
    _
  // Predicated region
  $region6: #{survival_predictor_forward.1} parent=0 // pred_check
    _
  $region7: #{survival_predictor_forward.1} parent=0 // pred_check_branch
    %13 = sbr.rel (0) target = $region9
  $region8: #{survival_predictor_forward.1} parent=0 // pred_region
    _
  $region9: #{survival_predictor_forward.1} parent=0 // pred_fallthru
    _
  // Predicated region
  $region10: #{survival_predictor_forward.1} parent=0 // pred_check
    _
  $region11: #{survival_predictor_forward.1} parent=0 // pred_check_branch
    %15 = sbr.rel (0) target = $region13
  $region12: #{survival_predictor_forward.1} parent=0 // pred_region
    _
  $region13: #{survival_predictor_forward.1} parent=0 // pred_fallthru
    _
  // Predicated region
  $region14: #{survival_predictor_forward.1} parent=0 // pred_check
    _
  $region15: #{survival_predictor_forward.1} parent=0 // pred_check_branch
    %17 = sbr.rel (0) target = $region17
  $region16: #{survival_predictor_forward.1} parent=0 // pred_region
    _
  $region17: #{survival_predictor_forward.1} parent=0 // pred_fallthru
    _
  // Predicated region
  $region18: #{survival_predictor_forward.1} parent=0 // pred_check
    _
  $region19: #{survival_predictor_forward.1} parent=0 // pred_check_branch
    %19 = sbr.rel (0) target = $region21
  $region20: #{survival_predictor_forward.1} parent=0 // pred_region
    _
  $region21: #{survival_predictor_forward.1} parent=0 // pred_fallthru
    _
  %v20 = vld [vmem:[%s0] sm:$0xff]
  %v21 = vld [vmem:[%s1] sm:$0xff]
  %v22 = vld [vmem:[%s1 + $0x8] sm:$0xff]
  %v23 = vld [vmem:[%s2] sm:$0x1]
  %v25 = vlaneseq
  %v26 = vshrl.u32 %v25, 7
  %v27 = vsub.s32 0, %v26
  %v28 = vrot.slane %v23, %v27
  %vm30 = vcmask 130048
  %v32 = vsel %vm30, %v20, 0
  %34 = vmatprep.subr.mxu0 0.0
  %35 = vmatpush1.msra.mxu0 0.0
  %36 = vmatprep.subr.mxu0 0.0
  %37 = vmatpush1.msra.mxu0 0.0
  %38 = vmatprep.subr.mxu0 0.0
  %39 = vmatpush1.msra.mxu0 0.0
  %40 = vmatprep.subr.mxu0 0.0
  %41 = vmatpush1.msra.mxu0 0.0
  %42 = vmatprep.subr.mxu0 0.0
  %43 = vmatpush1.msra.mxu0 0.0
  %44 = vmatprep.subr.mxu0 0.0
  %45 = vmatpush1.msra.mxu0 0.0
  %46 = vmatprep.subr.mxu0 0.0
  %47 = vmatpush1.msra.mxu0 0.0
  %48 = vmatprep.subr.mxu0 0.0
  %49 = vmatpush1.msra.mxu0 0.0
  %50 = vmatprep.subr.mxu0 0.0
  %51 = vmatpush1.msra.mxu0 0.0
  %52 = vmatprep.subr.mxu0 0.0
  %53 = vmatpush1.msra.mxu0 0.0
  %54 = vmatprep.subr.mxu0 0.0
  %55 = vmatpush1.msra.mxu0 0.0
  %56 = vmatprep.subr.mxu0 0.0
  %57 = vmatpush1.msra.mxu0 0.0
  %58 = vmatprep.subr.mxu0 0.0
  %59 = vmatpush1.msra.mxu0 0.0
  %60 = vmatprep.subr.mxu0 0.0
  %61 = vmatpush1.msra.mxu0 0.0
  %62 = vmatprep.subr.mxu0 0.0
  %63 = vmatpush1.msra.mxu0 %v22
  %64 = vmatprep.subr.mxu0 0.0
  %65 = vmatpush1.msra.mxu0 %v21
  %66 = vmatprep.subr.mxu0 0.0
  %67 = vmatpush2.msra.mxu0 0.0
  %68 = vmatprep.subr.mxu0 0.0
  %69 = vmatpush2.msra.mxu0 0.0
  %70 = vmatprep.subr.mxu0 0.0
  %71 = vmatpush2.msra.mxu0 0.0
  %72 = vmatprep.subr.mxu0 0.0
  %73 = vmatpush2.msra.mxu0 0.0
  %74 = vmatprep.subr.mxu0 0.0
  %75 = vmatpush2.msra.mxu0 0.0
  %76 = vmatprep.subr.mxu0 0.0
  %77 = vmatpush2.msra.mxu0 0.0
  %78 = vmatprep.subr.mxu0 0.0
  %79 = vmatpush2.msra.mxu0 0.0
  %80 = vmatprep.subr.mxu0 0.0
  %81 = vmatpush2.msra.mxu0 0.0
  %82 = vmatprep.subr.mxu0 0.0
  %83 = vmatpush2.msra.mxu0 0.0
  %84 = vmatprep.subr.mxu0 0.0
  %85 = vmatpush2.msra.mxu0 0.0
  %86 = vmatprep.subr.mxu0 0.0
  %87 = vmatpush2.msra.mxu0 0.0
  %88 = vmatprep.subr.mxu0 0.0
  %89 = vmatpush2.msra.mxu0 0.0
  %90 = vmatprep.subr.mxu0 0.0
  %91 = vmatpush2.msra.mxu0 0.0
  %92 = vmatprep.subr.mxu0 0.0
  %93 = vmatpush2.msra.mxu0 0.0
  %94 = vmatprep.subr.mxu0 0.0
  %95 = vmatpush2.msra.mxu0 0.0
  %96 = vmatprep.subr.mxu0 0.0
  %97 = vmatpush2.msra.mxu0 0.0
  %98 = vmatprep.mubr.f32.mxu0 0.0
  %99 = vmatmul.mubr.f32.gmra.mxu0 %v32
  %v100 = vpop.f32.mrf.mxu0
  %v101 = vadd.f32 %v28, %v100
  %v102 = vpop.f32.mrf.mxu0
  %103 = vdwg.mxu0
  %v104 = vmax.f32 %v101, 0.0
  %v105 = vld [vmem:[%s3] sm:$0xff]
  %v106 = vld [vmem:[%s3 + $0x8] sm:$0xff]
  %v107 = vld [vmem:[%s3 + $0x10] sm:$0xff]
  %v108 = vld [vmem:[%s3 + $0x18] sm:$0xff]
  %v109 = vld [vmem:[%s4] sm:$0x1]
  %v111 = vlaneseq
  %v112 = vshrl.u32 %v111, 7
  %v113 = vsub.s32 0, %v112
  %v114 = vrot.slane %v109, %v113
  %vm116 = vcmask 261120
  %v118 = vsel %vm116, %v104, 0
  %120 = vmatprep.subr.mxu0 0.0
  %121 = vmatpush1.msra.mxu0 0.0
  %122 = vmatprep.subr.mxu0 0.0
  %123 = vmatpush1.msra.mxu0 0.0
  %124 = vmatprep.subr.mxu0 0.0
  %125 = vmatpush1.msra.mxu0 0.0
  %126 = vmatprep.subr.mxu0 0.0
  %127 = vmatpush1.msra.mxu0 0.0
  %128 = vmatprep.subr.mxu0 0.0
  %129 = vmatpush1.msra.mxu0 0.0
  %130 = vmatprep.subr.mxu0 0.0
  %131 = vmatpush1.msra.mxu0 0.0
  %132 = vmatprep.subr.mxu0 0.0
  %133 = vmatpush1.msra.mxu0 0.0
  %134 = vmatprep.subr.mxu0 0.0
  %135 = vmatpush1.msra.mxu0 0.0
  %136 = vmatprep.subr.mxu0 0.0
  %137 = vmatpush1.msra.mxu0 0.0
  %138 = vmatprep.subr.mxu0 0.0
  %139 = vmatpush1.msra.mxu0 0.0
  %140 = vmatprep.subr.mxu0 0.0
  %141 = vmatpush1.msra.mxu0 0.0
  %142 = vmatprep.subr.mxu0 0.0
  %143 = vmatpush1.msra.mxu0 0.0
  %144 = vmatprep.subr.mxu0 0.0
  %145 = vmatpush1.msra.mxu0 %v108
  %146 = vmatprep.subr.mxu0 0.0
  %147 = vmatpush1.msra.mxu0 %v107
  %148 = vmatprep.subr.mxu0 0.0
  %149 = vmatpush1.msra.mxu0 %v106
  %150 = vmatprep.subr.mxu0 0.0
  %151 = vmatpush1.msra.mxu0 %v105
  %152 = vmatprep.subr.mxu0 0.0
  %153 = vmatpush2.msra.mxu0 0.0
  %154 = vmatprep.subr.mxu0 0.0
  %155 = vmatpush2.msra.mxu0 0.0
  %156 = vmatprep.subr.mxu0 0.0
  %157 = vmatpush2.msra.mxu0 0.0
  %158 = vmatprep.subr.mxu0 0.0
  %159 = vmatpush2.msra.mxu0 0.0
  %160 = vmatprep.subr.mxu0 0.0
  %161 = vmatpush2.msra.mxu0 0.0
  %162 = vmatprep.subr.mxu0 0.0
  %163 = vmatpush2.msra.mxu0 0.0
  %164 = vmatprep.subr.mxu0 0.0
  %165 = vmatpush2.msra.mxu0 0.0
  %166 = vmatprep.subr.mxu0 0.0
  %167 = vmatpush2.msra.mxu0 0.0
  %168 = vmatprep.subr.mxu0 0.0
  %169 = vmatpush2.msra.mxu0 0.0
  %170 = vmatprep.subr.mxu0 0.0
  %171 = vmatpush2.msra.mxu0 0.0
  %172 = vmatprep.subr.mxu0 0.0
  %173 = vmatpush2.msra.mxu0 0.0
  %174 = vmatprep.subr.mxu0 0.0
  %175 = vmatpush2.msra.mxu0 0.0
  %176 = vmatprep.subr.mxu0 0.0
  %177 = vmatpush2.msra.mxu0 0.0
  %178 = vmatprep.subr.mxu0 0.0
  %179 = vmatpush2.msra.mxu0 0.0
  %180 = vmatprep.subr.mxu0 0.0
  %181 = vmatpush2.msra.mxu0 0.0
  %182 = vmatprep.subr.mxu0 0.0
  %183 = vmatpush2.msra.mxu0 0.0
  %184 = vmatprep.mubr.f32.mxu0 0.0
  %185 = vmatmul.mubr.f32.gmra.mxu0 %v118
  %v186 = vpop.f32.mrf.mxu0
  %v187 = vadd.f32 %v114, %v186
  %v188 = vpop.f32.mrf.mxu0
  %189 = vdwg.mxu0
  %vm190 = vcmask 31744
  %v191 = vsel %vm190, %v187, -inf
  %192 = vmax.xlane.f32.xlu0 %v191
  %v193 = vpop.xlane.xlu0 %192
  %v194 = vsub.f32 %v187, %v193
  %v195 = vmul.f32 %v194, 1.442695
  %v196 = vpow.pop %v195
  %v197 = vsel %vm190, %v196, 0.0
  %198 = vadd.xlane.f32.xlu0 %v197
  %v199 = vpop.xlane.xlu0 %198
  %v200 = vrcp.pop %v199
  %v201 = vmul.f32 %v196, %v200
  %202 = vst.msk [vmem:[%s5] sm:$0xff] %vm190, %v201
  // Predicated region
  $region22: #{survival_predictor_forward.1} parent=0 // pred_check
    _
  $region23: #{survival_predictor_forward.1} parent=0 // pred_check_branch
    %204 = sbr.rel (0) target = $region25
  $region24: #{survival_predictor_forward.1} parent=0 // pred_region
    _
  $region25: #{survival_predictor_forward.1} parent=0 // pred_fallthru
    _
  // Predicated region
  $region26: #{survival_predictor_forward.1} parent=0 // pred_check
    _
  $region27: #{survival_predictor_forward.1} parent=0 // pred_check_branch
    %206 = sbr.rel (0) target = $region29
  $region28: #{survival_predictor_forward.1} parent=0 // pred_region
    _
  $region29: #{survival_predictor_forward.1} parent=0 // pred_fallthru
    _

</llo_original>
